<compile_context>
chip_gen: v6e
topology: v6e:2x2x1
jax: 0.10.0
libtpu: 0.0.40
codegen_flags: <defaults>
</compile_context>

<pallas_src>
import jax
import jax.numpy as jnp
from jax import lax
from jax.experimental import pallas as pl
from jax.experimental.pallas import tpu as pltpu

_BIG = 1e30  # sentinel squared distance for padded rows/cols (finite, so no NaNs downstream)


def _round_up(v, m):
    return (v + m - 1) // m * m


def _make_kernel(Nx, Ny, tm, tn, num_i, num_j, c):
    """Build the per-tile kernel. All arguments are Python statics."""
    need_row_mask = (num_i * tm) != Nx
    need_col_mask = (num_j * tn) != Ny
    c = float(c)
    half_c2 = 0.5 * c * c

    def huber(v):
        return jnp.where(v < c, 0.5 * v * v, c * v - half_c2)

    def kernel(gts_ref, preds_ref, out_ref, row_acc, col_acc, loss_acc):
        # grid = (batch b, row tile i over Nx, col tile j over Ny)
        i = pl.program_id(1)
        j = pl.program_id(2)

        x = gts_ref[0]      # (tm, D)  gts tile, native dtype
        yt = preds_ref[0]   # (D, tn)  preds tile, lane-dense, native dtype

        # zz[i,j] = x_i . y_j on the MXU, NN orientation.
        zz = lax.dot_general(x, yt, (((1,), (0,)), ((), ())),
                             preferred_element_type=jnp.float32)          # (tm, tn)
        xf = x.astype(jnp.float32)   # tiny: (tm, D)
        yf = yt.astype(jnp.float32)  # tiny: (D, tn)
        rx = jnp.sum(xf * xf, axis=1, keepdims=True)                      # (tm, 1)
        ry = jnp.sum(yf * yf, axis=0, keepdims=True)                      # (1, tn)

        # Padding masks on the rank-1 norms only: padded rows/cols get a huge norm so
        # they can never win a min.  (Full-tile iota/compare/where removed per review.)
        if need_row_mask:
            rows = lax.broadcasted_iota(jnp.int32, (tm, 1), 0) + i * tm
            rx = jnp.where(rows < Nx, rx, _BIG)
        if need_col_mask:
            cols = lax.broadcasted_iota(jnp.int32, (1, tn), 1) + j * tn
            ry = jnp.where(cols < Ny, ry, _BIG)

        P = rx + ry - 2.0 * zz                                            # (tm, tn)

        @pl.when(jnp.logical_and(i == 0, j == 0))
        def _():  # per-batch loss accumulator init
            loss_acc[...] = jnp.zeros_like(loss_acc)

        # ---- row path: fold tn lanes -> 128 lanes (pure-VPU vreg mins), run-min over j ----
        rfold = P[:, 0:128]
        for g in range(1, tn // 128):
            rfold = jnp.minimum(rfold, P[:, g * 128:(g + 1) * 128])       # (tm, 128)

        @pl.when(j == 0)
        def _():
            row_acc[...] = rfold

        @pl.when(j > 0)
        def _():
            row_acc[...] = jnp.minimum(row_acc[...], rfold)

        # ---- col path: fold tm sublanes -> 8 sublanes (pure-VPU), run-min over i ----
        cfold = P[0:8, :]
        for s in range(1, tm // 8):
            cfold = jnp.minimum(cfold, P[s * 8:(s + 1) * 8, :])           # (8, tn)

        @pl.when(i == 0)
        def _():
            col_acc[j] = cfold

        @pl.when(i > 0)
        def _():
            col_acc[j] = jnp.minimum(col_acc[j], cfold)

        # Finalize rows of this i-stripe: ONE cross-lane reduce (128 lanes), huber, sum.
        @pl.when(j == num_j - 1)
        def _():
            rmin = jnp.min(row_acc[...], axis=1, keepdims=True)           # (tm, 1)
            h = huber(rmin)
            if need_row_mask:
                rvalid = (lax.broadcasted_iota(jnp.int32, (tm, 1), 0) + i * tm) < Nx
                h = jnp.where(rvalid, h, 0.0)
            loss_acc[...] = loss_acc[...] + jnp.sum(h)

        # Finalize cols of this j-stripe: ONE cross-sublane reduce (8 sublanes), huber, sum.
        @pl.when(i == num_i - 1)
        def _():
            cmin = jnp.min(col_acc[j], axis=0, keepdims=True)             # (1, tn)
            h = huber(cmin)
            if need_col_mask:
                cvalid = (lax.broadcasted_iota(jnp.int32, (1, tn), 1) + j * tn) < Ny
                h = jnp.where(cvalid, h, 0.0)
            loss_acc[...] = loss_acc[...] + jnp.sum(h)

        # Emit this batch's partial loss as a lane-dense row (summed in the wrapper).
        # Output block index is constant over (i, j): writeback happens on batch change.
        @pl.when(jnp.logical_and(i == num_i - 1, j == num_j - 1))
        def _():
            out_ref[...] = loss_acc[...][None]                            # (1, 1, 128)

    return kernel


def global_align_loss(preds, gts, c, *, tm=256, tn=2048):
    """preds: (B, Ny, D), gts: (B, Nx, D), c: static Python scalar -> scalar loss."""
    B, Ny, D = preds.shape
    Bg, Nx, Dg = gts.shape
    assert B == Bg and D == Dg

    # Tile sizes: sublane-aligned rows, lane-aligned cols, clamped to the (padded) clouds.
    tm = min(_round_up(tm, 8), _round_up(Nx, 8))
    tn = min(_round_up(tn, 128), _round_up(Ny, 128))
    Nx_pad = _round_up(Nx, tm)
    Ny_pad = _round_up(Ny, tn)
    num_i = Nx_pad // tm
    num_j = Ny_pad // tn

    if Nx_pad != Nx:
        gts = jnp.pad(gts, ((0, 0), (0, Nx_pad - Nx), (0, 0)))
    # Layout plumbing in the wrapper: preds -> (B, D, Ny) so Ny is the lane dim.
    preds_t = jnp.transpose(preds, (0, 2, 1))
    if Ny_pad != Ny:
        preds_t = jnp.pad(preds_t, ((0, 0), (0, 0), (0, Ny_pad - Ny)))

    kernel = _make_kernel(Nx, Ny, tm, tn, num_i, num_j, c)

    # Explicit scoped-VMEM budget: double-buffered in/out blocks + compacted scratch
    # + in-kernel f32 temporaries (zz, P, fold buffers) with headroom.  Clamped to a
    # range that is valid on every generation (v7x physical VMEM is 64 MiB / TC).
    block_bytes = 2 * 4 * (tm * D + D * tn + 128)
    scratch_bytes = 4 * (tm * 128 + num_j * 8 * tn + 8 * 128)
    temp_bytes = 8 * tm * tn * 4
    vmem_limit = int(min(max(block_bytes + scratch_bytes + temp_bytes + (4 << 20),
                             32 << 20), 40 << 20))

    out = pl.pallas_call(
        kernel,
        out_shape=jax.ShapeDtypeStruct((B, 1, 128), jnp.float32),
        grid_spec=pltpu.PrefetchScalarGridSpec(
            num_scalar_prefetch=0,
            grid=(B, num_i, num_j),
            in_specs=[
                pl.BlockSpec((1, tm, D), lambda b, i, j: (b, i, 0)),   # gts
                pl.BlockSpec((1, D, tn), lambda b, i, j: (b, 0, j)),   # preds^T
            ],
            out_specs=pl.BlockSpec((1, 1, 128), lambda b, i, j: (b, 0, 0)),
            scratch_shapes=[
                pltpu.VMEM((tm, 128), jnp.float32),        # lane-folded running row-min
                pltpu.VMEM((num_j, 8, tn), jnp.float32),   # sublane-folded running col-min
                pltpu.VMEM((1, 128), jnp.float32),         # per-batch loss accumulator
            ],
        ),
        compiler_params=pltpu.CompilerParams(
            dimension_semantics=("parallel", "arbitrary", "arbitrary"),
            vmem_limit_bytes=vmem_limit,
        ),
    )(gts, preds_t)
    # TODO(synk): on v7x with B < 2 only one TensorCore does work; a second parallel axis
    # splitting the i (row-stripe) range would restore megacore utilization.
    return jnp.sum(out[:, 0, 0])


def _reference_loss(preds, gts, c):
    """Pure-JAX reference mirroring the PyTorch module."""
    zz = jnp.einsum("bid,bjd->bij", gts, preds)
    rx = jnp.sum(gts * gts, axis=-1)[:, :, None]
    ry = jnp.sum(preds * preds, axis=-1)[:, None, :]
    P = rx + ry - 2.0 * zz

    def huber(v):
        return jnp.where(v < c, 0.5 * v * v, c * v - 0.5 * c * c)

    return jnp.sum(huber(jnp.min(P, axis=1))) + jnp.sum(huber(jnp.min(P, axis=2)))


if __name__ == "__main__":
    key = jax.random.PRNGKey(0)

    def check(B, Nx, Ny, D, c, tm=256, tn=2048, seed_off=0):
        k1, k2 = jax.random.split(jax.random.fold_in(key, seed_off))
        gts = jax.random.normal(k1, (B, Nx, D), dtype=jnp.float32)
        preds = jax.random.normal(k2, (B, Ny, D), dtype=jnp.float32)
        loss = global_align_loss(preds, gts, c, tm=tm, tn=tn)
        jax.block_until_ready(loss)
        ref = _reference_loss(preds, gts, c)
        assert jnp.allclose(loss, ref, rtol=1e-4, atol=1e-3), (
            B, Nx, Ny, float(loss), float(ref))

    # Small point clouds consistent with the module (batch=2, 16 gts / 8 preds points, dim 3).
    check(2, 16, 8, 3, 0.5)
    # Non-aligned sizes + forced small tiles: exercises row/col padding masks, the
    # multi-tile online-min path (grid (3, 2, 2)) and both sublane/lane fold loops.
    check(3, 24, 300, 3, 0.7, tm=16, tn=256, seed_off=1)

    print("KERNEL_OK")
</pallas_src>

<mosaic_0001>
module attributes {stable_mosaic.version = 11 : i64} {
  func.func @kernel(%arg0: i32, %arg1: i32, %arg2: i32, %arg3: memref<1x16x3xf32, #tpu.memory_space<vmem>>, %arg4: memref<1x3x128xf32, #tpu.memory_space<vmem>>, %arg5: memref<1x1x128xf32, #tpu.memory_space<vmem>>, %arg6: memref<16x128xf32, #tpu.memory_space<vmem>>, %arg7: memref<1x8x128xf32, #tpu.memory_space<vmem>>, %arg8: memref<1x128xf32, #tpu.memory_space<vmem>>) attributes {dimension_semantics = [#tpu.dimension_semantics<parallel>, #tpu.dimension_semantics<arbitrary>, #tpu.dimension_semantics<arbitrary>], iteration_bounds = array<i64: 2, 1, 1>, scalar_prefetch = 0 : i64, scratch_operands = 3 : i64, tpu.core_type = #tpu.core_type<tc>, window_params = [{transform_indices = @transform_0, window_bounds = array<i64: 1, 16, 3>}, {transform_indices = @transform_1, window_bounds = array<i64: 1, 3, 128>}, {transform_indices = @transform_2, window_bounds = array<i64: 1, 1, 128>}]} {
    %c0 = arith.constant 0 : index
    %c0_0 = arith.constant 0 : index
    %c0_1 = arith.constant 0 : index
    %0 = vector.load %arg3[%c0, %c0_0, %c0_1] : memref<1x16x3xf32, #tpu.memory_space<vmem>>, vector<1x16x3xf32>
    %1 = vector.shape_cast %0 : vector<1x16x3xf32> to vector<16x3xf32>
    %c0_2 = arith.constant 0 : index
    %c0_3 = arith.constant 0 : index
    %c0_4 = arith.constant 0 : index
    %2 = vector.load %arg4[%c0_2, %c0_3, %c0_4] : memref<1x3x128xf32, #tpu.memory_space<vmem>>, vector<1x3x128xf32>
    %3 = vector.shape_cast %2 : vector<1x3x128xf32> to vector<3x128xf32>
    %cst = arith.constant dense<0.000000e+00> : vector<16x128xf32>
    %4 = tpu.matmul %1, %3, %cst {dimension_numbers = #tpu.dot_dimension_numbers<[1], [0], [0], [1], [0, 0, 1, 1], [], []>} : vector<16x3xf32>, vector<3x128xf32>, vector<16x128xf32> -> vector<16x128xf32>
    %5 = arith.mulf %1, %1 : vector<16x3xf32>
    %cst_5 = arith.constant dense<0.000000e+00> : vector<16xf32>
    %6 = vector.multi_reduction <add>, %5, %cst_5 [1] : vector<16x3xf32> to vector<16xf32>
    %7 = vector.shape_cast %6 : vector<16xf32> to vector<16x1xf32>
    %8 = arith.mulf %3, %3 : vector<3x128xf32>
    %cst_6 = arith.constant dense<0.000000e+00> : vector<128xf32>
    %9 = vector.multi_reduction <add>, %8, %cst_6 [0] : vector<3x128xf32> to vector<128xf32>
    %10 = vector.shape_cast %9 : vector<128xf32> to vector<1x128xf32>
    %11 = tpu.iota {dimensions = array<i32: 1>} : vector<1x128xi32>
    %c128_i32 = arith.constant 128 : i32
    %12 = arith.muli %arg2, %c128_i32 : i32
    %13 = vector.broadcast %12 : i32 to vector<1x128xi32>
    %14 = arith.addi %11, %13 : vector<1x128xi32>
    %c8_i32 = arith.constant 8 : i32
    %15 = vector.broadcast %c8_i32 : i32 to vector<1x128xi32>
    %16 = arith.cmpi slt, %14, %15 : vector<1x128xi32>
    %cst_7 = arith.constant 1.000000e+30 : f32
    %17 = vector.broadcast %cst_7 : f32 to vector<1x128xf32>
    %18 = arith.select %16, %10, %17 : vector<1x128xi1>, vector<1x128xf32>
    %19 = vector.broadcast %7 : vector<16x1xf32> to vector<16x128xf32>
    %20 = vector.broadcast %18 : vector<1x128xf32> to vector<16x128xf32>
    %21 = arith.addf %19, %20 : vector<16x128xf32>
    %cst_8 = arith.constant 2.000000e+00 : f32
    %22 = vector.broadcast %cst_8 : f32 to vector<16x128xf32>
    %23 = arith.mulf %22, %4 : vector<16x128xf32>
    %24 = arith.subf %21, %23 : vector<16x128xf32>
    %c0_i32 = arith.constant 0 : i32
    %25 = arith.cmpi eq, %arg1, %c0_i32 : i32
    %c0_i32_9 = arith.constant 0 : i32
    %26 = arith.cmpi eq, %arg2, %c0_i32_9 : i32
    %27 = arith.andi %25, %26 : i1
    %28 = arith.extui %27 : i1 to i32
    %c0_i32_10 = arith.constant 0 : i32
    %29 = arith.cmpi ne, %28, %c0_i32_10 : i32
    scf.if %29 {
      %cst_26 = arith.constant 0.000000e+00 : f32
      %56 = vector.broadcast %cst_26 : f32 to vector<1x128xf32>
      %c0_27 = arith.constant 0 : index
      %c0_28 = arith.constant 0 : index
      %57 = vector.load %arg8[%c0_27, %c0_28] : memref<1x128xf32, #tpu.memory_space<vmem>>, vector<1x128xf32>
      tpu.vector_store %arg8[%c0_27, %c0_28], %56 {strides = array<i32>} : memref<1x128xf32, #tpu.memory_space<vmem>>, vector<1x128xf32>,
    } else {
    }
    %c0_i32_11 = arith.constant 0 : i32
    %30 = arith.cmpi eq, %arg2, %c0_i32_11 : i32
    %31 = arith.extui %30 : i1 to i32
    %c0_i32_12 = arith.constant 0 : i32
    %32 = arith.cmpi ne, %31, %c0_i32_12 : i32
    scf.if %32 {
      %c0_26 = arith.constant 0 : index
      %c0_27 = arith.constant 0 : index
      %56 = vector.load %arg6[%c0_26, %c0_27] : memref<16x128xf32, #tpu.memory_space<vmem>>, vector<16x128xf32>
      tpu.vector_store %arg6[%c0_26, %c0_27], %24 {strides = array<i32>} : memref<16x128xf32, #tpu.memory_space<vmem>>, vector<16x128xf32>,
    } else {
    }
    %c0_i32_13 = arith.constant 0 : i32
    %33 = arith.cmpi sgt, %arg2, %c0_i32_13 : i32
    %34 = arith.extui %33 : i1 to i32
    %c0_i32_14 = arith.constant 0 : i32
    %35 = arith.cmpi ne, %34, %c0_i32_14 : i32
    scf.if %35 {
      %c0_26 = arith.constant 0 : index
      %c0_27 = arith.constant 0 : index
      %56 = vector.load %arg6[%c0_26, %c0_27] : memref<16x128xf32, #tpu.memory_space<vmem>>, vector<16x128xf32>
      %57 = arith.minimumf %56, %24 : vector<16x128xf32>
      %c0_28 = arith.constant 0 : index
      %c0_29 = arith.constant 0 : index
      %58 = vector.load %arg6[%c0_28, %c0_29] : memref<16x128xf32, #tpu.memory_space<vmem>>, vector<16x128xf32>
      tpu.vector_store %arg6[%c0_28, %c0_29], %57 {strides = array<i32>} : memref<16x128xf32, #tpu.memory_space<vmem>>, vector<16x128xf32>,
    } else {
    }
    %36 = vector.extract_strided_slice %24 {offsets = [0, 0], sizes = [8, 128], strides = [1, 1]} : vector<16x128xf32> to vector<8x128xf32>
    %37 = vector.extract_strided_slice %24 {offsets = [8, 0], sizes = [8, 128], strides = [1, 1]} : vector<16x128xf32> to vector<8x128xf32>
    %38 = arith.minimumf %36, %37 : vector<8x128xf32>
    %c0_i32_15 = arith.constant 0 : i32
    %39 = arith.cmpi eq, %arg1, %c0_i32_15 : i32
    %40 = arith.extui %39 : i1 to i32
    %c0_i32_16 = arith.constant 0 : i32
    %41 = arith.cmpi ne, %40, %c0_i32_16 : i32
    scf.if %41 {
      %56 = arith.index_cast %arg2 : i32 to index
      %c0_26 = arith.constant 0 : index
      %c0_27 = arith.constant 0 : index
      %57 = vector.load %arg7[%56, %c0_26, %c0_27] : memref<1x8x128xf32, #tpu.memory_space<vmem>>, vector<1x8x128xf32>
      %58 = vector.shape_cast %57 : vector<1x8x128xf32> to vector<8x128xf32>
      %59 = vector.shape_cast %38 : vector<8x128xf32> to vector<1x8x128xf32>
      tpu.vector_store %arg7[%56, %c0_26, %c0_27], %59 {strides = array<i32>} : memref<1x8x128xf32, #tpu.memory_space<vmem>>, vector<1x8x128xf32>,
    } else {
    }
    %c0_i32_17 = arith.constant 0 : i32
    %42 = arith.cmpi sgt, %arg1, %c0_i32_17 : i32
    %43 = arith.extui %42 : i1 to i32
    %c0_i32_18 = arith.constant 0 : i32
    %44 = arith.cmpi ne, %43, %c0_i32_18 : i32
    scf.if %44 {
      %56 = arith.index_cast %arg2 : i32 to index
      %c0_26 = arith.constant 0 : index
      %c0_27 = arith.constant 0 : index
      %57 = vector.load %arg7[%56, %c0_26, %c0_27] : memref<1x8x128xf32, #tpu.memory_space<vmem>>, vector<1x8x128xf32>
      %58 = vector.shape_cast %57 : vector<1x8x128xf32> to vector<8x128xf32>
      %59 = arith.minimumf %58, %38 : vector<8x128xf32>
      %60 = arith.index_cast %arg2 : i32 to index
      %c0_28 = arith.constant 0 : index
      %c0_29 = arith.constant 0 : index
      %61 = vector.load %arg7[%60, %c0_28, %c0_29] : memref<1x8x128xf32, #tpu.memory_space<vmem>>, vector<1x8x128xf32>
      %62 = vector.shape_cast %61 : vector<1x8x128xf32> to vector<8x128xf32>
      %63 = vector.shape_cast %59 : vector<8x128xf32> to vector<1x8x128xf32>
      tpu.vector_store %arg7[%60, %c0_28, %c0_29], %63 {strides = array<i32>} : memref<1x8x128xf32, #tpu.memory_space<vmem>>, vector<1x8x128xf32>,
    } else {
    }
    %c0_i32_19 = arith.constant 0 : i32
    %45 = arith.cmpi eq, %arg2, %c0_i32_19 : i32
    %46 = arith.extui %45 : i1 to i32
    %c0_i32_20 = arith.constant 0 : i32
    %47 = arith.cmpi ne, %46, %c0_i32_20 : i32
    scf.if %47 {
      %c0_26 = arith.constant 0 : index
      %c0_27 = arith.constant 0 : index
      %56 = vector.load %arg6[%c0_26, %c0_27] : memref<16x128xf32, #tpu.memory_space<vmem>>, vector<16x128xf32>
      %cst_28 = arith.constant dense<0x7F800000> : vector<16xf32>
      %57 = vector.multi_reduction <minimumf>, %56, %cst_28 [1] : vector<16x128xf32> to vector<16xf32>
      %58 = vector.shape_cast %57 : vector<16xf32> to vector<16x1xf32>
      %cst_29 = arith.constant 5.000000e-01 : f32
      %59 = vector.broadcast %cst_29 : f32 to vector<16x1xf32>
      %60 = arith.cmpf olt, %58, %59 : vector<16x1xf32>
      %cst_30 = arith.constant 5.000000e-01 : f32
      %61 = vector.broadcast %cst_30 : f32 to vector<16x1xf32>
      %62 = arith.mulf %61, %58 : vector<16x1xf32>
      %63 = arith.mulf %62, %58 : vector<16x1xf32>
      %cst_31 = arith.constant 5.000000e-01 : f32
      %64 = vector.broadcast %cst_31 : f32 to vector<16x1xf32>
      %65 = arith.mulf %64, %58 : vector<16x1xf32>
      %cst_32 = arith.constant 1.250000e-01 : f32
      %66 = vector.broadcast %cst_32 : f32 to vector<16x1xf32>
      %67 = arith.subf %65, %66 : vector<16x1xf32>
      %68 = arith.select %60, %63, %67 : vector<16x1xi1>, vector<16x1xf32>
      %c0_33 = arith.constant 0 : index
      %c0_34 = arith.constant 0 : index
      %69 = vector.load %arg8[%c0_33, %c0_34] : memref<1x128xf32, #tpu.memory_space<vmem>>, vector<1x128xf32>
      %70 = vector.shape_cast %68 : vector<16x1xf32> to vector<1x16x1xf32>
      %cst_35 = arith.constant dense<0.000000e+00> : vector<1xf32>
      %71 = vector.multi_reduction <add>, %70, %cst_35 [1, 2] : vector<1x16x1xf32> to vector<1xf32>
      %72 = vector.shape_cast %71 : vector<1xf32> to vector<1x1x1xf32>
      %73 = vector.extract %72[0, 0, 0] : f32 from vector<1x1x1xf32>
      %74 = vector.broadcast %73 : f32 to vector<1x128xf32>
      %75 = arith.addf %69, %74 : vector<1x128xf32>
      %c0_36 = arith.constant 0 : index
      %c0_37 = arith.constant 0 : index
      %76 = vector.load %arg8[%c0_36, %c0_37] : memref<1x128xf32, #tpu.memory_space<vmem>>, vector<1x128xf32>
      tpu.vector_store %arg8[%c0_36, %c0_37], %75 {strides = array<i32>} : memref<1x128xf32, #tpu.memory_space<vmem>>, vector<1x128xf32>,
    } else {
    }
    %c0_i32_21 = arith.constant 0 : i32
    %48 = arith.cmpi eq, %arg1, %c0_i32_21 : i32
    %49 = arith.extui %48 : i1 to i32
    %c0_i32_22 = arith.constant 0 : i32
    %50 = arith.cmpi ne, %49, %c0_i32_22 : i32
    scf.if %50 {
      %56 = arith.index_cast %arg2 : i32 to index
      %c0_26 = arith.constant 0 : index
      %c0_27 = arith.constant 0 : index
      %57 = vector.load %arg7[%56, %c0_26, %c0_27] : memref<1x8x128xf32, #tpu.memory_space<vmem>>, vector<1x8x128xf32>
      %58 = vector.shape_cast %57 : vector<1x8x128xf32> to vector<8x128xf32>
      %cst_28 = arith.constant dense<0x7F800000> : vector<128xf32>
      %59 = vector.multi_reduction <minimumf>, %58, %cst_28 [0] : vector<8x128xf32> to vector<128xf32>
      %60 = vector.shape_cast %59 : vector<128xf32> to vector<1x128xf32>
      %cst_29 = arith.constant 5.000000e-01 : f32
      %61 = vector.broadcast %cst_29 : f32 to vector<1x128xf32>
      %62 = arith.cmpf olt, %60, %61 : vector<1x128xf32>
      %cst_30 = arith.constant 5.000000e-01 : f32
      %63 = vector.broadcast %cst_30 : f32 to vector<1x128xf32>
      %64 = arith.mulf %63, %60 : vector<1x128xf32>
      %65 = arith.mulf %64, %60 : vector<1x128xf32>
      %cst_31 = arith.constant 5.000000e-01 : f32
      %66 = vector.broadcast %cst_31 : f32 to vector<1x128xf32>
      %67 = arith.mulf %66, %60 : vector<1x128xf32>
      %cst_32 = arith.constant 1.250000e-01 : f32
      %68 = vector.broadcast %cst_32 : f32 to vector<1x128xf32>
      %69 = arith.subf %67, %68 : vector<1x128xf32>
      %70 = arith.select %62, %65, %69 : vector<1x128xi1>, vector<1x128xf32>
      %71 = tpu.iota {dimensions = array<i32: 1>} : vector<1x128xi32>
      %c128_i32_33 = arith.constant 128 : i32
      %72 = arith.muli %arg2, %c128_i32_33 : i32
      %73 = vector.broadcast %72 : i32 to vector<1x128xi32>
      %74 = arith.addi %71, %73 : vector<1x128xi32>
      %c8_i32_34 = arith.constant 8 : i32
      %75 = vector.broadcast %c8_i32_34 : i32 to vector<1x128xi32>
      %76 = arith.cmpi slt, %74, %75 : vector<1x128xi32>
      %cst_35 = arith.constant 0.000000e+00 : f32
      %77 = vector.broadcast %cst_35 : f32 to vector<1x128xf32>
      %78 = arith.select %76, %70, %77 : vector<1x128xi1>, vector<1x128xf32>
      %c0_36 = arith.constant 0 : index
      %c0_37 = arith.constant 0 : index
      %79 = vector.load %arg8[%c0_36, %c0_37] : memref<1x128xf32, #tpu.memory_space<vmem>>, vector<1x128xf32>
      %80 = vector.shape_cast %78 : vector<1x128xf32> to vector<1x1x128xf32>
      %cst_38 = arith.constant dense<0.000000e+00> : vector<1xf32>
      %81 = vector.multi_reduction <add>, %80, %cst_38 [1, 2] : vector<1x1x128xf32> to vector<1xf32>
      %82 = vector.shape_cast %81 : vector<1xf32> to vector<1x1x1xf32>
      %83 = vector.extract %82[0, 0, 0] : f32 from vector<1x1x1xf32>
      %84 = vector.broadcast %83 : f32 to vector<1x128xf32>
      %85 = arith.addf %79, %84 : vector<1x128xf32>
      %c0_39 = arith.constant 0 : index
      %c0_40 = arith.constant 0 : index
      %86 = vector.load %arg8[%c0_39, %c0_40] : memref<1x128xf32, #tpu.memory_space<vmem>>, vector<1x128xf32>
      tpu.vector_store %arg8[%c0_39, %c0_40], %85 {strides = array<i32>} : memref<1x128xf32, #tpu.memory_space<vmem>>, vector<1x128xf32>,
    } else {
    }
    %c0_i32_23 = arith.constant 0 : i32
    %51 = arith.cmpi eq, %arg1, %c0_i32_23 : i32
    %c0_i32_24 = arith.constant 0 : i32
    %52 = arith.cmpi eq, %arg2, %c0_i32_24 : i32
    %53 = arith.andi %51, %52 : i1
    %54 = arith.extui %53 : i1 to i32
    %c0_i32_25 = arith.constant 0 : i32
    %55 = arith.cmpi ne, %54, %c0_i32_25 : i32
    scf.if %55 {
      %c0_26 = arith.constant 0 : index
      %c0_27 = arith.constant 0 : index
      %56 = vector.load %arg8[%c0_26, %c0_27] : memref<1x128xf32, #tpu.memory_space<vmem>>, vector<1x128xf32>
      %57 = vector.shape_cast %56 : vector<1x128xf32> to vector<1x1x128xf32>
      %c0_28 = arith.constant 0 : index
      %c0_29 = arith.constant 0 : index
      %c0_30 = arith.constant 0 : index
      %58 = vector.load %arg5[%c0_28, %c0_29, %c0_30] : memref<1x1x128xf32, #tpu.memory_space<vmem>>, vector<1x1x128xf32>
      tpu.vector_store %arg5[%c0_28, %c0_29, %c0_30], %57 {strides = array<i32>} : memref<1x1x128xf32, #tpu.memory_space<vmem>>, vector<1x1x128xf32>,
    } else {
    }
    return
  }
  func.func @transform_0(%arg0: i32, %arg1: i32, %arg2: i32) -> (i32, i32, i32) {
    %c0_i32 = arith.constant 0 : i32
    %c0_i32_0 = arith.constant 0 : i32
    return %arg0, %arg1, %c0_i32 : i32, i32, i32
  }
  func.func @transform_1(%arg0: i32, %arg1: i32, %arg2: i32) -> (i32, i32, i32) {
    %c0_i32 = arith.constant 0 : i32
    %c0_i32_0 = arith.constant 0 : i32
    return %arg0, %c0_i32, %arg2 : i32, i32, i32
  }
  func.func @transform_2(%arg0: i32, %arg1: i32, %arg2: i32) -> (i32, i32, i32) {
    %c0_i32 = arith.constant 0 : i32
    %c0_i32_0 = arith.constant 0 : i32
    %c0_i32_1 = arith.constant 0 : i32
    return %arg0, %c0_i32, %c0_i32_0 : i32, i32, i32
  }
}

</mosaic_0001>

<llo_original>
// kernel: tpu_custom_call.1
$region0: #{tpu_custom_call.1}
  #allocation0 [shape = 'u32[]', space=smem, size = 0x4, offset = 0x4, fixed_abs, tag = 'smem constant byte address 0x4 - core index']
  #allocation1 [shape = 'u32[144,128]{1,0:T(1,128)}', space=vmem, size = 0x12000, scoped, tag = 'internal scratch']
  #allocation2 [shape = 'f32[16,128]{1,0:T(8,128)}', space=vmem, size = 0x2000, scoped, tag = 'scratch operand']
  #allocation3 [shape = 'f32[1,8,128]{2,1,0:T(8,128)}', space=vmem, size = 0x1000, scoped, tag = 'scratch operand']
  #allocation4 [shape = 'f32[1,128]{1,0:T(1,128)}', space=vmem, size = 0x200, scoped, tag = 'scratch operand']
  %s0 = inlined_call_operand.vmem [shape: f32[2,16,3], index: 0, kind: input, shape index: {}]
  %s1 = inlined_call_operand.vmem [shape: f32[2,3,128], index: 1, kind: input, shape index: {}]
  %s2 = inlined_call_operand.hbm [shape: f32[2,1,128], index: 2, kind: output, shape index: {}]
  %s3 = sld [smem:[#allocation0]]
  $region73: #{tpu_custom_call.1} parent=0
    _
  %s5 = ssub.s32 1, %s3
  %s6 = scalar_select 0, %s5, %s3
  $region1: #{tpu_custom_call.1} parent=0
    #allocation5 [shape = 'u8[1024]{0}', space=vmem, size = 0x400, scoped, tag = 'output window, operand 0']
    #allocation6 [shape = 's32[2]{0}', space=sflag, size = 0x8, scoped, tag = 'scoped memory for tpu_custom_call.1']
    %7 = vsyncpa [#allocation6], 0
    %s8 = scalar_lea.sflag [#allocation6], 1
    %9 = vsyncpa %s8, 0
    loop: start=0, step=1, limit=4
    $region2: #{tpu_custom_call.1} parent=1 // loop_pre_header
      _
    $region3: #{tpu_custom_call.1} parent=1 // loop_header
      %s11 = sphi 0, %s15
      %p12 = scmp.ge.s32.totalorder %s11, 4
      %s18 = sphi 0, %s37
      %s19 = sphi 0, %s33
      %s20 = sphi 0, %s29
      %s21 = sphi 0, %s18
      %s22 = sphi 0, %s19
      %s23 = sphi 0, %s20
      %s24 = sphi 0, %s21
      %s25 = sphi 0, %s22
      %s26 = sphi 0, %s23
      %s42 = sphi 0, %s44
      %s45 = sphi 0, %s42
      %s46 = sphi 0, %s45
      %s62 = sphi 0, %s46
      %s70 = sphi 0, %s72
      %s73 = sphi 0, %s70
      %s74 = sphi 0, %s73
      %s90 = sphi 0, %s74
      %s96 = sphi 0, %s98
      %s99 = sphi 0, %s96
      %s100 = sphi 0, %s99
      %s116 = sphi 0, %s100
    $region4: #{tpu_custom_call.1} parent=1 // loop_header_branch
      %14 = sbr.rel (%p12) target = $region8
    $region5: #{tpu_custom_call.1} parent=1 // loop_body
      %s16 = ssub.s32 %s11, 1
      %s17 = ssub.s32 %s11, 2
      %s27 = sadd.s32 1, %s20
      %p28 = scmp.ge.s32.totalorder %s27, 1
      %s29 = scalar_select %p28, 0, %s27
      %s30 = sadd.s32 1, %s19
      %s31 = scalar_select %p28, %s30, %s19
      %p32 = scmp.ge.s32.totalorder %s31, 1
      %s33 = scalar_select %p32, 0, %s31
      %s34 = sadd.s32 1, %s18
      %s35 = scalar_select %p32, %s34, %s18
      %p36 = scmp.ge.s32.totalorder %s35, 2
      %s37 = scalar_select %p36, 0, %s35
      %s38 = ssub.s32 %s18, %s37
      %s39 = ssub.s32 %s19, %s33
      %s40 = sor.u32 %s38, %s39
      %p41 = scmp.eq.s32.totalorder %s40, 0
      %s43 = sadd.s32 %s42, 1
      %s44 = scalar_select %p41, %s42, %s43
      %p47 = pneg %p41
      %p48 = scmp.eq.s32.totalorder %s11, 1
      %p49 = por %p47, %p48
      %p50 = scmp.ne.s32.totalorder %s42, %s45
      %p51 = scmp.eq.s32.totalorder %s11, 0
      %p52 = por %p50, %p51
      %p53 = scmp.ne.s32.totalorder %s42, %s45
      %p54 = scmp.eq.s32.totalorder %s16, 1
      %p55 = por %p53, %p54
      %p56 = scmp.ne.s32.totalorder %s45, %s46
      %p57 = scmp.eq.s32.totalorder %s16, 0
      %p58 = por %p56, %p57
      %p59 = scmp.ne.s32.totalorder %s45, %s46
      %p60 = scmp.eq.s32.totalorder %s17, 1
      %p61 = por %p59, %p60
      %p63 = scmp.ne.s32.totalorder %s46, %s62
      %p64 = scmp.eq.s32.totalorder %s17, 0
      %p65 = por %p63, %p64
      %s66 = ssub.s32 %s18, %s37
      %s67 = ssub.s32 %s20, %s29
      %s68 = sor.u32 %s66, %s67
      %p69 = scmp.eq.s32.totalorder %s68, 0
      %s71 = sadd.s32 %s70, 1
      %s72 = scalar_select %p69, %s70, %s71
      %p75 = pneg %p69
      %p76 = scmp.eq.s32.totalorder %s11, 1
      %p77 = por %p75, %p76
      %p78 = scmp.ne.s32.totalorder %s70, %s73
      %p79 = scmp.eq.s32.totalorder %s11, 0
      %p80 = por %p78, %p79
      %p81 = scmp.ne.s32.totalorder %s70, %s73
      %p82 = scmp.eq.s32.totalorder %s16, 1
      %p83 = por %p81, %p82
      %p84 = scmp.ne.s32.totalorder %s73, %s74
      %p85 = scmp.eq.s32.totalorder %s16, 0
      %p86 = por %p84, %p85
      %p87 = scmp.ne.s32.totalorder %s73, %s74
      %p88 = scmp.eq.s32.totalorder %s17, 1
      %p89 = por %p87, %p88
      %p91 = scmp.ne.s32.totalorder %s74, %s90
      %p92 = scmp.eq.s32.totalorder %s17, 0
      %p93 = por %p91, %p92
      %s94 = ssub.s32 %s18, %s37
      %p95 = scmp.eq.s32.totalorder %s94, 0
      %s97 = sadd.s32 %s96, 1
      %s98 = scalar_select %p95, %s96, %s97
      %p101 = pneg %p95
      %p102 = scmp.eq.s32.totalorder %s11, 1
      %p103 = por %p101, %p102
      %p104 = scmp.ne.s32.totalorder %s96, %s99
      %p105 = scmp.eq.s32.totalorder %s11, 0
      %p106 = por %p104, %p105
      %p107 = scmp.ne.s32.totalorder %s96, %s99
      %p108 = scmp.eq.s32.totalorder %s16, 1
      %p109 = por %p107, %p108
      %p110 = scmp.ne.s32.totalorder %s99, %s100
      %p111 = scmp.eq.s32.totalorder %s16, 0
      %p112 = por %p110, %p111
      %p113 = scmp.ne.s32.totalorder %s99, %s100
      %p114 = scmp.eq.s32.totalorder %s17, 1
      %p115 = por %p113, %p114
      %p117 = scmp.ne.s32.totalorder %s100, %s116
      %p118 = scmp.eq.s32.totalorder %s17, 0
      %p119 = por %p117, %p118
      %p120 = scmp.le.s32.totalorder 1, %s11
      %p121 = scmp.lt.s32.totalorder %s11, 3
      %p122 = pnand %p120, %p121
      %p123 = pneg %p122
      // Predicated region
      $region9: #{tpu_custom_call.1} parent=5 // pred_check
        _
      $region10: #{tpu_custom_call.1} parent=5 // pred_check_branch
        %125 = sbr.rel (%p122) target = $region12
      $region11: #{tpu_custom_call.1} parent=5 // pred_region
        %s126 = ssub.s32 %s11, 1
      $region12: #{tpu_custom_call.1} parent=5 // pred_fallthru
        _
      %p127 = scmp.lt.s32.totalorder %s11, 2
      // Predicated region
      $region13: #{tpu_custom_call.1} parent=5 // pred_check
        %p128 = pneg %p127
      $region14: #{tpu_custom_call.1} parent=5 // pred_check_branch
        %130 = sbr.rel (%p128) target = $region16
      $region15: #{tpu_custom_call.1} parent=5 // pred_region
        // Predicated region
        $region17: #{tpu_custom_call.1} parent=15 // pred_check
          %p131 = pneg %p52
        $region18: #{tpu_custom_call.1} parent=15 // pred_check_branch
          %133 = sbr.rel (%p131) target = $region20
        $region19: #{tpu_custom_call.1} parent=15 // pred_region
          %s134 = smul.u32 2, %s19
          %p135 = scmp.lt.s32.totalorder %s18, 1
          %s136 = scalar_select %p135, %s18, 1
          %p137 = scmp.lt.s32.totalorder %s134, 1
          %s138 = scalar_select %p137, %s134, 1
          %s139 = smul.addr %s136, 2
          %s140 = sadd.s32 %s138, %s139
          %s141 = smul.addr %s140, 8
          %s142 = scalar_lea.vmem %s0, %s141
          %s143 = smul.u32 2, %s19
        $region20: #{tpu_custom_call.1} parent=15 // pred_fallthru
          _
        // Predicated region
        $region21: #{tpu_custom_call.1} parent=15 // pred_check
          %p144 = pneg %p80
        $region22: #{tpu_custom_call.1} parent=15 // pred_check_branch
          %146 = sbr.rel (%p144) target = $region24
        $region23: #{tpu_custom_call.1} parent=15 // pred_region
          %p147 = scmp.lt.s32.totalorder %s18, 1
          %s148 = scalar_select %p147, %s18, 1
          %p149 = scmp.lt.s32.totalorder %s20, 0
          %s150 = scalar_select %p149, %s20, 0
          %s151 = sadd.s32 %s150, %s148
          %s152 = smul.addr %s151, 4
          %s153 = scalar_lea.vmem %s1, %s152
        $region24: #{tpu_custom_call.1} parent=15 // pred_fallthru
          _
      $region16: #{tpu_custom_call.1} parent=5 // pred_fallthru
        _
      %p154 = scmp.le.s32.totalorder 1, %s11
      %p155 = scmp.lt.s32.totalorder %s11, 3
      %p156 = pnand %p154, %p155
      %p157 = pneg %p156
      // Predicated region
      $region25: #{tpu_custom_call.1} parent=5 // pred_check
        _
      $region26: #{tpu_custom_call.1} parent=5 // pred_check_branch
        %159 = sbr.rel (%p156) target = $region28
      $region27: #{tpu_custom_call.1} parent=5 // pred_region
        %s160 = ssub.s32 %s11, 1
        %s161 = smul.u32 2, %s22
        %p162 = scmp.lt.s32.totalorder %s21, 1
        %s163 = scalar_select %p162, %s21, 1
        %p164 = scmp.lt.s32.totalorder %s161, 1
        %s165 = scalar_select %p164, %s161, 1
        %s166 = smul.addr %s163, 2
        %s167 = sadd.s32 %s165, %s166
        %s168 = smul.addr %s167, 8
        %s169 = scalar_lea.vmem %s0, %s168
        %p170 = pneg %p58
        %p171 = pneg %p55
        %p172 = scmp.lt.s32.totalorder %s21, 1
        %s173 = scalar_select %p172, %s21, 1
        %p174 = scmp.lt.s32.totalorder %s23, 0
        %s175 = scalar_select %p174, %s23, 0
        %s176 = sadd.s32 %s175, %s173
        %s177 = smul.addr %s176, 4
        %s178 = scalar_lea.vmem %s1, %s177
        %p179 = pneg %p86
        %p180 = pneg %p83
        %p181 = pneg %p112
        %p182 = pneg %p109
        %s183 = sand.u32 %s99, 1
        %s184 = scalar_lea.sflag [#allocation6], %s183
        %s185 = sand.u32 %s99, 1
        %s186 = scalar_lea.vmem [#allocation5], %s185
        %s187 = smul.u32 2, %s22
        %p188 = scmp.lt.s32.totalorder %s21, 1
        %s189 = scalar_select %p188, %s21, 1
        %p190 = scmp.lt.s32.totalorder %s187, 1
        %s191 = scalar_select %p190, %s187, 1
        %s192 = smul.addr %s189, 2
        %s193 = sadd.s32 %s191, %s192
        %s194 = smul.addr %s193, 8
        %s195 = scalar_lea.vmem %s0, %s194
        %s196 = smul.u32 2, %s22
        %p197 = scmp.lt.s32.totalorder %s21, 1
        %s198 = scalar_select %p197, %s21, 1
        %p199 = scmp.lt.s32.totalorder %s23, 0
        %s200 = scalar_select %p199, %s23, 0
        %s201 = sadd.s32 %s200, %s198
        %s202 = smul.addr %s201, 4
        %s203 = scalar_lea.vmem %s1, %s202
        %v204 = vld [vmem:[%s195] sm:$0xff]
        %v205 = vld [vmem:[%s195 + $0x8] sm:$0xff]
        %v206 = vld [vmem:[%s203] sm:$0x7]
        %vm207 = vcmask 23552
        %v209 = vsel %vm207, %v204, 0
        %v212 = vsel %vm207, %v205, 0
        %vm214 = vcmask 1042432
        %v216 = vsel %vm214, %v206, 0
        %218 = vmatprep.subr.mxu0 0.0
        %219 = vmatpush1.msra.mxu0 0.0
        %220 = vmatprep.subr.mxu0 0.0
        %221 = vmatpush1.msra.mxu0 0.0
        %222 = vmatprep.subr.mxu0 0.0
        %223 = vmatpush1.msra.mxu0 0.0
        %224 = vmatprep.subr.mxu0 0.0
        %225 = vmatpush1.msra.mxu0 0.0
        %226 = vmatprep.subr.mxu0 0.0
        %227 = vmatpush1.msra.mxu0 0.0
        %228 = vmatprep.subr.mxu0 0.0
        %229 = vmatpush1.msra.mxu0 0.0
        %230 = vmatprep.subr.mxu0 0.0
        %231 = vmatpush1.msra.mxu0 0.0
        %232 = vmatprep.subr.mxu0 0.0
        %233 = vmatpush1.msra.mxu0 0.0
        %234 = vmatprep.subr.mxu0 0.0
        %235 = vmatpush1.msra.mxu0 0.0
        %236 = vmatprep.subr.mxu0 0.0
        %237 = vmatpush1.msra.mxu0 0.0
        %238 = vmatprep.subr.mxu0 0.0
        %239 = vmatpush1.msra.mxu0 0.0
        %240 = vmatprep.subr.mxu0 0.0
        %241 = vmatpush1.msra.mxu0 0.0
        %242 = vmatprep.subr.mxu0 0.0
        %243 = vmatpush1.msra.mxu0 0.0
        %244 = vmatprep.subr.mxu0 0.0
        %245 = vmatpush1.msra.mxu0 0.0
        %246 = vmatprep.subr.mxu0 0.0
        %247 = vmatpush1.msra.mxu0 0.0
        %248 = vmatprep.subr.mxu0 0.0
        %249 = vmatpush1.msra.mxu0 %v216
        %250 = vmatprep.subr.mxu0 0.0
        %251 = vmatpush2.msra.mxu0 0.0
        %252 = vmatprep.subr.mxu0 0.0
        %253 = vmatpush2.msra.mxu0 0.0
        %254 = vmatprep.subr.mxu0 0.0
        %255 = vmatpush2.msra.mxu0 0.0
        %256 = vmatprep.subr.mxu0 0.0
        %257 = vmatpush2.msra.mxu0 0.0
        %258 = vmatprep.subr.mxu0 0.0
        %259 = vmatpush2.msra.mxu0 0.0
        %260 = vmatprep.subr.mxu0 0.0
        %261 = vmatpush2.msra.mxu0 0.0
        %262 = vmatprep.subr.mxu0 0.0
        %263 = vmatpush2.msra.mxu0 0.0
        %264 = vmatprep.subr.mxu0 0.0
        %265 = vmatpush2.msra.mxu0 0.0
        %266 = vmatprep.subr.mxu0 0.0
        %267 = vmatpush2.msra.mxu0 0.0
        %268 = vmatprep.subr.mxu0 0.0
        %269 = vmatpush2.msra.mxu0 0.0
        %270 = vmatprep.subr.mxu0 0.0
        %271 = vmatpush2.msra.mxu0 0.0
        %272 = vmatprep.subr.mxu0 0.0
        %273 = vmatpush2.msra.mxu0 0.0
        %274 = vmatprep.subr.mxu0 0.0
        %275 = vmatpush2.msra.mxu0 0.0
        %276 = vmatprep.subr.mxu0 0.0
        %277 = vmatpush2.msra.mxu0 0.0
        %278 = vmatprep.subr.mxu0 0.0
        %279 = vmatpush2.msra.mxu0 0.0
        %280 = vmatprep.subr.mxu0 0.0
        %281 = vmatpush2.msra.mxu0 0.0
        %282 = vmatprep.mubr.f32.mxu0 0.0
        %283 = vmatmul.mubr.f32.gmra.mxu0 %v209
        %v284 = vpop.f32.mrf.mxu0
        %v285 = vadd.f32 0.0, %v284
        %v286 = vpop.f32.mrf.mxu0
        %287 = vmatprep.mubr.f32.mxu0 0.0
        %288 = vmatmul.mubr.f32.gmra.mxu0 %v212
        %v289 = vpop.f32.mrf.mxu0
        %v290 = vadd.f32 0.0, %v289
        %v291 = vpop.f32.mrf.mxu0
        %292 = vdwg.mxu0
        %v293 = vmul.f32 %v204, %v204
        %v294 = vmul.f32 %v205, %v205
        %v295 = vsel %vm207, %v293, 0.0
        %296 = vadd.xlane.f32.xlu0 %v295
        %v297 = vpop.xlane.xlu0 %296
        %v298 = vsel %vm207, %v294, 0.0
        %299 = vadd.xlane.f32.xlu0 %v298
        %v300 = vpop.xlane.xlu0 %299
        %v301 = vmul.f32 %v206, %v206
        %v302 = vsel %vm214, %v301, 0.0
        %v303 = vrot.slane %v302, 4
        %v304 = vadd.f32 %v302, %v303
        %v305 = vrot.slane %v304, 2
        %v306 = vadd.f32 %v304, %v305
        %v307 = vrot.slane %v306, 1
        %v308 = vadd.f32 %v306, %v307
        %v309 = vlaneseq
        %v310 = vand.u32 %v309, 127
        %s311 = smul.u32 %s23, 128
        %v312 = vstv %s311
        %v313 = vadd.s32 %v310, %v312
        %vm314 = vcmp.lt.s32.totalorder %v313, 8
        %v315 = vsel %vm314, %v308, 1e+30
        %v316 = vadd.f32 %v297, %v315
        %v317 = vadd.f32 %v300, %v315
        %v318 = vmul.f32 %v285, 2.0
        %v319 = vmul.f32 %v290, 2.0
        %v320 = vsub.f32 %v316, %v318
        %v321 = vsub.f32 %v317, %v319
        %p322 = scmp.eq.s32.totalorder %s22, 0
        %p323 = scmp.eq.s32.totalorder %s23, 0
        %p324 = pnand %p322, %p323
        %p325 = pneg %p324
        // Predicated region
        $region29: #{tpu_custom_call.1} parent=27 // pred_check
          _
        $region30: #{tpu_custom_call.1} parent=27 // pred_check_branch
          %327 = sbr.rel (%p324) target = $region32
        $region31: #{tpu_custom_call.1} parent=27 // pred_region
          %328 = vst [vmem:[#allocation4] sm:$0x1] 0.0
        $region32: #{tpu_custom_call.1} parent=27 // pred_fallthru
          _
        // Predicated region
        $region33: #{tpu_custom_call.1} parent=27 // pred_check
          %p329 = pneg %p323
        $region34: #{tpu_custom_call.1} parent=27 // pred_check_branch
          %331 = sbr.rel (%p329) target = $region36
        $region35: #{tpu_custom_call.1} parent=27 // pred_region
          %332 = vst [vmem:[#allocation2] sm:$0xff] %v320
          %333 = vst [vmem:[#allocation2 + $0x8] sm:$0xff] %v321
        $region36: #{tpu_custom_call.1} parent=27 // pred_fallthru
          _
        %p334 = scmp.gt.s32.totalorder %s23, 0
        // Predicated region
        $region37: #{tpu_custom_call.1} parent=27 // pred_check
          %p335 = pneg %p334
        $region38: #{tpu_custom_call.1} parent=27 // pred_check_branch
          %337 = sbr.rel (%p335) target = $region40
        $region39: #{tpu_custom_call.1} parent=27 // pred_region
          %v338 = vld [vmem:[#allocation2] sm:$0xff]
          %v339 = vld [vmem:[#allocation2 + $0x8] sm:$0xff]
          %v340 = vmin.f32 %v338, %v320
          %v341 = vmin.f32 %v339, %v321
          %342 = vst [vmem:[#allocation2] sm:$0xff] %v340
          %343 = vst [vmem:[#allocation2 + $0x8] sm:$0xff] %v341
        $region40: #{tpu_custom_call.1} parent=27 // pred_fallthru
          _
        %v344 = vmin.f32 %v320, %v321
        // Predicated region
        $region41: #{tpu_custom_call.1} parent=27 // pred_check
          %p345 = pneg %p322
        $region42: #{tpu_custom_call.1} parent=27 // pred_check_branch
          %347 = sbr.rel (%p345) target = $region44
        $region43: #{tpu_custom_call.1} parent=27 // pred_region
          %s348 = smul.u32 %s23, 8
          %s349 = scalar_lea.vmem [#allocation3], %s348
          %350 = vst [vmem:[%s349] sm:$0xff] %v344
        $region44: #{tpu_custom_call.1} parent=27 // pred_fallthru
          _
        %p351 = scmp.gt.s32.totalorder %s22, 0
        // Predicated region
        $region45: #{tpu_custom_call.1} parent=27 // pred_check
          %p352 = pneg %p351
        $region46: #{tpu_custom_call.1} parent=27 // pred_check_branch
          %354 = sbr.rel (%p352) target = $region48
        $region47: #{tpu_custom_call.1} parent=27 // pred_region
          %s355 = smul.u32 %s23, 8
          %s356 = scalar_lea.vmem [#allocation3], %s355
          %v357 = vld [vmem:[%s356] sm:$0xff]
          %v358 = vmin.f32 %v357, %v344
          %359 = vst [vmem:[%s356] sm:$0xff] %v358
        $region48: #{tpu_custom_call.1} parent=27 // pred_fallthru
          _
        // Predicated region
        $region49: #{tpu_custom_call.1} parent=27 // pred_check
          %p360 = pneg %p323
        $region50: #{tpu_custom_call.1} parent=27 // pred_check_branch
          %362 = sbr.rel (%p360) target = $region52
        $region51: #{tpu_custom_call.1} parent=27 // pred_region
          %v363 = vld [vmem:[#allocation2] sm:$0xff]
          %v364 = vld [vmem:[#allocation2 + $0x8] sm:$0xff]
          %365 = vmin.xlane.f32.xlu0 %v363
          %v366 = vpop.xlane.xlu0 %365
          %367 = vmin.xlane.f32.xlu0 %v364
          %v368 = vpop.xlane.xlu0 %367
          %vm369 = vcmp.lt.f32.partialorder %v366, 0.5
          %vm370 = vcmp.lt.f32.partialorder %v368, 0.5
          %v371 = vmul.f32 %v366, 0.5
          %v372 = vmul.f32 %v368, 0.5
          %v373 = vmul.f32 %v371, %v366
          %v374 = vmul.f32 %v372, %v368
          %v375 = vsub.f32 %v371, 0.125
          %v376 = vsub.f32 %v372, 0.125
          %v377 = vsel %vm369, %v373, %v375
          %v378 = vsel %vm370, %v374, %v376
          %v379 = vld [vmem:[#allocation4] sm:$0x1]
          %vm380 = vcmask 7168
          %v381 = vsel %vm380, %v377, 0.0
          %v382 = vsel %vm380, %v378, 0.0
          %v383 = vadd.f32 %v381, %v382
          %384 = vadd.xlane.f32.xlu0 %v383
          %v385 = vpop.xlane.xlu0 %384
          %v386 = vrot.slane %v385, 4
          %v387 = vadd.f32 %v385, %v386
          %v388 = vrot.slane %v387, 2
          %v389 = vadd.f32 %v387, %v388
          %v390 = vrot.slane %v389, 1
          %v391 = vadd.f32 %v389, %v390
          %s392 = vtos %v391
          %v393 = vstv %s392
          %v394 = vadd.f32 %v379, %v393
          %395 = vst [vmem:[#allocation4] sm:$0x1] %v394
        $region52: #{tpu_custom_call.1} parent=27 // pred_fallthru
          _
        // Predicated region
        $region53: #{tpu_custom_call.1} parent=27 // pred_check
          %p396 = pneg %p322
        $region54: #{tpu_custom_call.1} parent=27 // pred_check_branch
          %398 = sbr.rel (%p396) target = $region56
        $region55: #{tpu_custom_call.1} parent=27 // pred_region
          %s399 = smul.u32 %s23, 8
          %s400 = scalar_lea.vmem [#allocation3], %s399
          %v401 = vld [vmem:[%s400] sm:$0xff]
          %v402 = vrot.slane %v401, 4
          %v403 = vmin.f32 %v401, %v402
          %v404 = vrot.slane %v403, 2
          %v405 = vmin.f32 %v403, %v404
          %v406 = vrot.slane %v405, 1
          %v407 = vmin.f32 %v405, %v406
          %vm408 = vcmp.lt.f32.partialorder %v407, 0.5
          %v409 = vmul.f32 %v407, 0.5
          %v410 = vmul.f32 %v409, %v407
          %v411 = vsub.f32 %v409, 0.125
          %v412 = vsel %vm408, %v410, %v411
          %v413 = vsel %vm314, %v412, 0.0
          %v414 = vld [vmem:[#allocation4] sm:$0x1]
          %vm415 = vcmask 1040384
          %v416 = vsel %vm415, %v413, 0.0
          %417 = vadd.xlane.f32.xlu0 %v416
          %v418 = vpop.xlane.xlu0 %417
          %v419 = vrot.slane %v418, 4
          %v420 = vadd.f32 %v418, %v419
          %v421 = vrot.slane %v420, 2
          %v422 = vadd.f32 %v420, %v421
          %v423 = vrot.slane %v422, 1
          %v424 = vadd.f32 %v422, %v423
          %s425 = vtos %v424
          %v426 = vstv %s425
          %v427 = vadd.f32 %v414, %v426
          %428 = vst [vmem:[#allocation4] sm:$0x1] %v427
        $region56: #{tpu_custom_call.1} parent=27 // pred_fallthru
          _
        // Predicated region
        $region57: #{tpu_custom_call.1} parent=27 // pred_check
          _
        $region58: #{tpu_custom_call.1} parent=27 // pred_check_branch
          %430 = sbr.rel (%p324) target = $region60
        $region59: #{tpu_custom_call.1} parent=27 // pred_region
          %v431 = vld [vmem:[#allocation4] sm:$0x1]
          %432 = vst [vmem:[%s186] sm:$0x1] %v431
        $region60: #{tpu_custom_call.1} parent=27 // pred_fallthru
          _
        %s433 = sand.u32 %s99, 1
        %s434 = scalar_lea.sflag [#allocation6], %s433
        %s435 = sand.u32 %s99, 1
        %s436 = scalar_lea.vmem [#allocation5], %s435
        // Predicated region
        $region61: #{tpu_custom_call.1} parent=27 // pred_check
          %p437 = pneg %p109
        $region62: #{tpu_custom_call.1} parent=27 // pred_check_branch
          %439 = sbr.rel (%p437) target = $region64
        $region63: #{tpu_custom_call.1} parent=27 // pred_region
          %s441 = ssub.s32 16, 16
          %442 = vsyncadd %s434, %s441
          %s443 = smul.addr %s21, 16
          %s444 = scalar_lea.hbm %s2, %s443
          %s446 = sshll.u32 %s436, 4
          %s447 = int_to_ptr.vmem [resolvable:$true] %s446
          %449 = dma.vmem_to_hbm [thread:$0]  %s447, 16, %s444, %s434
        $region64: #{tpu_custom_call.1} parent=27 // pred_fallthru
          _
      $region28: #{tpu_custom_call.1} parent=5 // pred_fallthru
        _
      %p450 = scmp.le.s32.totalorder 2, %s11
      // Predicated region
      $region65: #{tpu_custom_call.1} parent=5 // pred_check
        %p451 = pneg %p450
      $region66: #{tpu_custom_call.1} parent=5 // pred_check_branch
        %453 = sbr.rel (%p451) target = $region68
      $region67: #{tpu_custom_call.1} parent=5 // pred_region
        %s454 = ssub.s32 %s11, 2
        // Predicated region
        $region69: #{tpu_custom_call.1} parent=67 // pred_check
          %p455 = pneg %p115
        $region70: #{tpu_custom_call.1} parent=67 // pred_check_branch
          %457 = sbr.rel (%p455) target = $region72
        $region71: #{tpu_custom_call.1} parent=67 // pred_region
          %s458 = sand.u32 %s100, 1
          %s459 = scalar_lea.sflag [#allocation6], %s458
          %s460 = sand.u32 %s100, 1
          %s461 = scalar_lea.vmem [#allocation5], %s460
          %462 = dma.done %s459, 16
        $region72: #{tpu_custom_call.1} parent=67 // pred_fallthru
          _
      $region68: #{tpu_custom_call.1} parent=5 // pred_fallthru
        _
    $region6: #{tpu_custom_call.1} parent=1 // loop_footer
      %s15 = sadd.s32 1, %s11
    $region7: #{tpu_custom_call.1} parent=1 // loop_footer_branch
      %10 = sbr.rel target = $region3
    $region8: #{tpu_custom_call.1} parent=1 // loop_exit
      _
    %463 = vsyncpa [#allocation6], 1
    %s464 = scalar_lea.sflag [#allocation6], 1
    %465 = vsyncpa %s464, 1

</llo_original>
